<compile_context>
chip_gen: v7x
topology: tpu7x:2x2x1
jax: 0.10.0
libtpu: 0.0.40
codegen_flags: <defaults>
</compile_context>

<pallas_src>
import functools

import jax
import jax.numpy as jnp
from jax.experimental import pallas as pl
from jax.experimental.pallas import tpu as pltpu

NUM_CLASSES = 8
LANE = 128
SUBLANE = 8


def _cls_head_kernel(x_ref, w_ref, b_ref, o_ref, acc_ref):
    # x_ref: (TB, C, THW)  NCHW view -- channels on sublanes, spatial on lanes.
    # w_ref: (Cp, Np)      transposed weight, 1/HW pre-folded, zero-padded.
    # b_ref: (1, Np)       o_ref: (TB, Np) f32      acc_ref: VMEM f32 (TB, Cp)
    hw = pl.program_id(1)
    c = x_ref.shape[1]

    @pl.when(hw == 0)
    def _():
        acc_ref[...] = jnp.zeros_like(acc_ref)

    # Spatial sum-pool for this HW chunk; accumulate in f32 regardless of input dtype.
    s = jnp.sum(x_ref[...], axis=-1, dtype=jnp.float32)          # (TB, C)
    acc_ref[:, :c] = acc_ref[:, :c] + s                           # pad lanes stay 0

    @pl.when(hw == pl.num_programs(1) - 1)
    def _():
        out = jnp.dot(acc_ref[...], w_ref[...], preferred_element_type=jnp.float32)
        o_ref[...] = (out + b_ref[...]).astype(o_ref.dtype)


def _round_up(v, m):
    return ((v + m - 1) // m) * m


def _vmem_capacity():
    try:
        return int(pltpu.get_tpu_info().vmem_capacity_bytes)
    except Exception:
        return 64 * 1024 * 1024  # conservative default (v7x per-TC VMEM)


def _pick_batch_tile(b, c, hw, itemsize, budget):
    """Multiple-of-8 divisor of b (or full b).  Prefers >= 2 tiles (feeds both v7x
    TensorCores on the 'parallel' axis) and a tile that stays inside the VMEM budget
    even at the minimum lane-aligned HW chunk."""
    min_hw = min(hw, LANE)

    def tile_bytes(tb):
        return tb * _round_up(c, SUBLANE) * min_hw * itemsize

    divs = [d for d in range(SUBLANE, min(b, 1024) + 1, SUBLANE) if b % d == 0]
    for tb in sorted(divs, reverse=True):
        if b // tb >= 2 and tile_bytes(tb) <= budget:
            return tb
    for tb in sorted(divs, reverse=True):
        if tile_bytes(tb) <= budget:
            return tb
    if divs:
        return divs[0]
    return b  # small / awkward batch: one full-B tile (full-dim block is legal)


def _pick_hw_tile(hw, tb, c, itemsize, budget):
    """Pick the spatial chunk.  Returns (thw, hw_padded); hw_padded != hw only as a
    last resort for huge non-lane-aligned HW."""
    row_bytes = max(1, tb * _round_up(c, SUBLANE) * itemsize)
    max_cols = max(LANE, (budget // row_bytes) // LANE * LANE)
    if hw % LANE == 0:
        start = min(hw, max_cols)
        for thw in range(start, LANE - 1, -LANE):
            if hw % thw == 0:
                return thw, hw
    # HW not lane-aligned: full-extent block keeps x un-padded in HBM.
    if hw * row_bytes <= budget or hw <= LANE:
        return hw, hw
    # Last resort: zero-pad HW to a lane-aligned chunk (one extra pass over x, but the
    # double-buffered tile is guaranteed to respect the VMEM budget).
    return max_cols, _round_up(hw, max_cols)


@functools.partial(jax.jit, static_argnames=("max_tile_bytes",))
def cls_output_head(x, weight, bias, *, max_tile_bytes=None):
    """x: (B, C, H, W) NCHW.  weight: (num_classes, C).  bias: (num_classes,).
    Returns float32 logits of shape (B, num_classes)."""
    B, C, H, W = x.shape
    HW = H * W
    N = weight.shape[0]

    Cp = _round_up(max(C, LANE), LANE)   # contraction dim of the tiny finalize dot
    Np = _round_up(max(N, LANE), LANE)   # lane-dense output -> unmasked stores

    cap = _vmem_capacity()
    if max_tile_bytes is None:
        # <= cap/8 keeps double-buffered x tiles comfortable on every generation:
        # 128 MiB (v5e/v6e) -> 16 MiB tiles, 64 MiB (v7x per-TC) -> 8 MiB tiles.
        max_tile_bytes = min(cap // 8, 16 * 1024 * 1024)

    itemsize = x.dtype.itemsize
    TB = _pick_batch_tile(B, C, HW, itemsize, max_tile_bytes)
    THW, HWp = _pick_hw_tile(HW, TB, C, itemsize, max_tile_bytes)

    # (B, C, H, W) -> (B, C, HW): free reshape of the contiguous NCHW layout.
    x3 = x.reshape(B, C, HW)
    if HWp != HW:
        x3 = jnp.pad(x3, ((0, 0), (0, 0), (0, HWp - HW)))  # zeros: sum unaffected

    # Fold 1/HW mean into the transposed, zero-padded weight; keep f32 (tiny, fetched
    # once since its block index is constant). Bias padded to (1, Np).
    w_t = jnp.zeros((Cp, Np), jnp.float32).at[:C, :N].set(
        weight.astype(jnp.float32).T * (1.0 / HW))
    b2 = jnp.zeros((1, Np), jnp.float32).at[:, :N].set(bias.astype(jnp.float32))

    grid = (B // TB, HWp // THW)

    x_tile_bytes = TB * _round_up(C, SUBLANE) * THW * itemsize
    fixed_bytes = 2 * (Cp * Np * 4 + Np * 4) + TB * Cp * 4 + 2 * TB * Np * 4
    needed = 2 * x_tile_bytes + fixed_bytes
    vmem_limit = int(min(cap * 3 // 4, max(needed + (8 << 20), 32 << 20)))

    cost = pl.CostEstimate(
        flops=B * HW * C + 2 * B * Cp * Np + B * Np,
        transcendentals=0,
        bytes_accessed=(x3.size * itemsize + Cp * Np * 4 + Np * 4 + B * Np * 4),
    )

    out_padded = pl.pallas_call(
        _cls_head_kernel,
        out_shape=jax.ShapeDtypeStruct((B, Np), jnp.float32),
        grid_spec=pltpu.PrefetchScalarGridSpec(
            num_scalar_prefetch=0,
            grid=grid,
            in_specs=[
                pl.BlockSpec((TB, C, THW), lambda b, s: (b, 0, s)),
                pl.BlockSpec((Cp, Np), lambda b, s: (0, 0)),
                pl.BlockSpec((1, Np), lambda b, s: (0, 0)),
            ],
            out_specs=pl.BlockSpec((TB, Np), lambda b, s: (b, 0)),
            scratch_shapes=[pltpu.VMEM((TB, Cp), jnp.float32)],
        ),
        compiler_params=pltpu.CompilerParams(
            dimension_semantics=("parallel", "arbitrary"),
            vmem_limit_bytes=vmem_limit,
        ),
        cost_estimate=cost,
    )(x3, w_t, b2)

    return out_padded[:, :N]


if __name__ == "__main__":
    key = jax.random.PRNGKey(0)
    kx, kw, kb = jax.random.split(key, 3)

    B, C, H, W = 2, 4, 16, 16          # in_planes = C = 4
    x = jax.random.normal(kx, (B, C, H, W), dtype=jnp.float32)

    bound = 1.0 / (C ** 0.5)
    weight = jax.random.uniform(kw, (NUM_CLASSES, C), minval=-bound, maxval=bound,
                                dtype=jnp.float32)
    bias = jax.random.uniform(kb, (NUM_CLASSES,), minval=-bound, maxval=bound,
                              dtype=jnp.float32)

    # Small tile budget so the HW reduction axis has >1 grid step at demo shapes
    # (exercises the pl.when init/finalize accumulator path).
    out = cls_output_head(x, weight, bias, max_tile_bytes=4 * 1024)
    out = jax.block_until_ready(out)

    # Reference in plain JAX (same math as the PyTorch module).
    ref = jnp.mean(x, axis=(2, 3)) @ weight.T + bias
    assert out.shape == (B, NUM_CLASSES)
    assert out.dtype == jnp.float32
    assert jnp.allclose(out, ref, atol=1e-5, rtol=1e-5)

    print("KERNEL_OK")
</pallas_src>

<mosaic_0001>
module attributes {stable_mosaic.version = 11 : i64} {
  func.func @_cls_head_kernel(%arg0: i32, %arg1: i32, %arg2: memref<2x4x128xf32, #tpu.memory_space<vmem>>, %arg3: memref<128x128xf32, #tpu.memory_space<vmem>>, %arg4: memref<1x128xf32, #tpu.memory_space<vmem>>, %arg5: memref<2x128xf32, #tpu.memory_space<vmem>>, %arg6: memref<2x128xf32, #tpu.memory_space<vmem>>) attributes {dimension_semantics = [#tpu.dimension_semantics<parallel>, #tpu.dimension_semantics<arbitrary>], iteration_bounds = array<i64: 1, 2>, scalar_prefetch = 0 : i64, scratch_operands = 1 : i64, tpu.core_type = #tpu.core_type<tc>, window_params = [{transform_indices = @transform_0, window_bounds = array<i64: 2, 4, 128>}, {pipeline_mode = #tpu.pipeline_mode<synchronous>, transform_indices = @transform_1, window_bounds = array<i64: 128, 128>}, {pipeline_mode = #tpu.pipeline_mode<synchronous>, transform_indices = @transform_2, window_bounds = array<i64: 1, 128>}, {transform_indices = @transform_3, window_bounds = array<i64: 2, 128>}]} {
    %c0_i32 = arith.constant 0 : i32
    %0 = arith.cmpi eq, %arg1, %c0_i32 : i32
    %1 = arith.extui %0 : i1 to i32
    %c0_i32_0 = arith.constant 0 : i32
    %2 = arith.cmpi ne, %1, %c0_i32_0 : i32
    scf.if %2 {
      %cst_8 = arith.constant 0.000000e+00 : f32
      %11 = vector.broadcast %cst_8 : f32 to vector<2x128xf32>
      %c0_9 = arith.constant 0 : index
      %c0_10 = arith.constant 0 : index
      %12 = vector.load %arg6[%c0_9, %c0_10] : memref<2x128xf32, #tpu.memory_space<vmem>>, vector<2x128xf32>
      tpu.vector_store %arg6[%c0_9, %c0_10], %11 {strides = array<i32>} : memref<2x128xf32, #tpu.memory_space<vmem>>, vector<2x128xf32>,
    } else {
    }
    %c0 = arith.constant 0 : index
    %c0_1 = arith.constant 0 : index
    %c0_2 = arith.constant 0 : index
    %3 = vector.load %arg2[%c0, %c0_1, %c0_2] : memref<2x4x128xf32, #tpu.memory_space<vmem>>, vector<2x4x128xf32>
    %cst = arith.constant dense<0.000000e+00> : vector<2x4xf32>
    %4 = vector.multi_reduction <add>, %3, %cst [2] : vector<2x4x128xf32> to vector<2x4xf32>
    %c0_3 = arith.constant 0 : index
    %c0_4 = arith.constant 0 : index
    %5 = vector.load %arg6[%c0_3, %c0_4] : memref<2x128xf32, #tpu.memory_space<vmem>>, vector<2x4xf32>
    %6 = arith.addf %5, %4 : vector<2x4xf32>
    %c0_5 = arith.constant 0 : index
    %c0_6 = arith.constant 0 : index
    %7 = vector.load %arg6[%c0_5, %c0_6] : memref<2x128xf32, #tpu.memory_space<vmem>>, vector<2x4xf32>
    tpu.vector_store %arg6[%c0_5, %c0_6], %6 {strides = array<i32>} : memref<2x128xf32, #tpu.memory_space<vmem>>, vector<2x4xf32>,
    %c1_i32 = arith.constant 1 : i32
    %8 = arith.cmpi eq, %arg1, %c1_i32 : i32
    %9 = arith.extui %8 : i1 to i32
    %c0_i32_7 = arith.constant 0 : i32
    %10 = arith.cmpi ne, %9, %c0_i32_7 : i32
    scf.if %10 {
      %c0_8 = arith.constant 0 : index
      %c0_9 = arith.constant 0 : index
      %11 = vector.load %arg6[%c0_8, %c0_9] : memref<2x128xf32, #tpu.memory_space<vmem>>, vector<2x128xf32>
      %c0_10 = arith.constant 0 : index
      %c0_11 = arith.constant 0 : index
      %12 = vector.load %arg3[%c0_10, %c0_11] : memref<128x128xf32, #tpu.memory_space<vmem>>, vector<128x128xf32>
      %cst_12 = arith.constant dense<0.000000e+00> : vector<2x128xf32>
      %13 = tpu.matmul %11, %12, %cst_12 {dimension_numbers = #tpu.dot_dimension_numbers<[1], [0], [0], [1], [0, 0, 1, 1], [], []>} : vector<2x128xf32>, vector<128x128xf32>, vector<2x128xf32> -> vector<2x128xf32>
      %c0_13 = arith.constant 0 : index
      %c0_14 = arith.constant 0 : index
      %14 = vector.load %arg4[%c0_13, %c0_14] : memref<1x128xf32, #tpu.memory_space<vmem>>, vector<1x128xf32>
      %15 = vector.broadcast %14 : vector<1x128xf32> to vector<2x128xf32>
      %16 = arith.addf %13, %15 : vector<2x128xf32>
      %c0_15 = arith.constant 0 : index
      %c0_16 = arith.constant 0 : index
      %17 = vector.load %arg5[%c0_15, %c0_16] : memref<2x128xf32, #tpu.memory_space<vmem>>, vector<2x128xf32>
      tpu.vector_store %arg5[%c0_15, %c0_16], %16 {strides = array<i32>} : memref<2x128xf32, #tpu.memory_space<vmem>>, vector<2x128xf32>,
    } else {
    }
    return
  }
  func.func @transform_0(%arg0: i32, %arg1: i32) -> (i32, i32, i32) {
    %c0_i32 = arith.constant 0 : i32
    %c0_i32_0 = arith.constant 0 : i32
    return %arg0, %c0_i32, %arg1 : i32, i32, i32
  }
  func.func @transform_1(%arg0: i32, %arg1: i32) -> (i32, i32) {
    %c0_i32 = arith.constant 0 : i32
    %c0_i32_0 = arith.constant 0 : i32
    %c0_i32_1 = arith.constant 0 : i32
    return %c0_i32, %c0_i32_0 : i32, i32
  }
  func.func @transform_2(%arg0: i32, %arg1: i32) -> (i32, i32) {
    %c0_i32 = arith.constant 0 : i32
    %c0_i32_0 = arith.constant 0 : i32
    %c0_i32_1 = arith.constant 0 : i32
    return %c0_i32, %c0_i32_0 : i32, i32
  }
  func.func @transform_3(%arg0: i32, %arg1: i32) -> (i32, i32) {
    %c0_i32 = arith.constant 0 : i32
    %c0_i32_0 = arith.constant 0 : i32
    return %arg0, %c0_i32 : i32, i32
  }
}

</mosaic_0001>

<llo_original>
// kernel: cls_output_head.1
$region0: #{cls_output_head.1}
  #allocation0 [shape = 'u32[]', space=smem, size = 0x4, offset = 0x4, fixed_abs, tag = 'smem constant byte address 0x4 - core index']
  #allocation1 [shape = 'u32[144,128]{1,0:T(1,128)}', space=vmem, size = 0x12000, scoped, tag = 'internal scratch']
  #allocation2 [shape = 'f32[2,128]{1,0:T(2,128)}', space=vmem, size = 0x400, scoped, tag = 'scratch operand']
  %s0 = inlined_call_operand.vmem [shape: f32[2,4,256], index: 0, kind: input, shape index: {}]
  %s1 = inlined_call_operand.vmem [shape: f32[128,128], index: 1, kind: input, shape index: {}]
  %s2 = inlined_call_operand.vmem [shape: f32[1,128], index: 2, kind: input, shape index: {}]
  %s3 = inlined_call_operand.hbm [shape: f32[2,128], index: 3, kind: output, shape index: {}]
  %s4 = sld [smem:[#allocation0]]
  $region94: #{cls_output_head.1} parent=0
    _
  %s6 = ssub.s32 1, %s4
  %s7 = scalar_select 0, %s6, %s4
  $region1: #{cls_output_head.1} parent=0
    #allocation3 [shape = 'u8[8192]{0}', space=vmem, size = 0x2000, scoped, tag = 'input window, operand 0']
    #allocation4 [shape = 'u8[1024]{0}', space=vmem, size = 0x400, scoped, tag = 'output window, operand 0, single buffered']
    #allocation5 [shape = 's32[2]{0}', space=sflag, size = 0x8, scoped, tag = 'scoped memory for cls_output_head.1']
    %8 = vsyncpa [#allocation5], 0
    loop: start=0, step=1, limit=4
    $region2: #{cls_output_head.1} parent=1 // loop_pre_header
      _
    $region3: #{cls_output_head.1} parent=1 // loop_header
      %s10 = sphi 0, %s14
      %p11 = scmp.ge.s32.totalorder %s10, 4
      %s17 = sphi 0, %s29
      %s18 = sphi 0, %s25
      %s19 = sphi 0, %s17
      %s20 = sphi 0, %s18
      %s21 = sphi 0, %s19
      %s22 = sphi 0, %s20
      %s34 = sphi 0, %s36
      %s37 = sphi 0, %s34
      %s38 = sphi 0, %s37
      %s54 = sphi 0, %s38
      %s58 = sphi 0, %s58
      %s60 = sphi 0, %s58
      %s61 = sphi 0, %s60
      %s75 = sphi 0, %s61
      %s79 = sphi 0, %s79
      %s81 = sphi 0, %s79
      %s82 = sphi 0, %s81
      %s96 = sphi 0, %s82
      %s102 = sphi 0, %s104
      %s105 = sphi 0, %s102
      %s106 = sphi 0, %s105
      %s122 = sphi 0, %s106
    $region4: #{cls_output_head.1} parent=1 // loop_header_branch
      %13 = sbr.rel (%p11) target = $region8
    $region5: #{cls_output_head.1} parent=1 // loop_body
      %s15 = ssub.s32 %s10, 1
      %s16 = ssub.s32 %s10, 2
      %s23 = sadd.s32 1, %s18
      %p24 = scmp.ge.s32.totalorder %s23, 2
      %s25 = scalar_select %p24, 0, %s23
      %s26 = sadd.s32 1, %s17
      %s27 = scalar_select %p24, %s26, %s17
      %p28 = scmp.ge.s32.totalorder %s27, 1
      %s29 = scalar_select %p28, 0, %s27
      %s30 = ssub.s32 %s17, %s29
      %s31 = ssub.s32 %s18, %s25
      %s32 = sor.u32 %s30, %s31
      %p33 = scmp.eq.s32.totalorder %s32, 0
      %s35 = sadd.s32 %s34, 1
      %s36 = scalar_select %p33, %s34, %s35
      %p39 = pneg %p33
      %p40 = scmp.eq.s32.totalorder %s10, 1
      %p41 = por %p39, %p40
      %p42 = scmp.ne.s32.totalorder %s34, %s37
      %p43 = scmp.eq.s32.totalorder %s10, 0
      %p44 = por %p42, %p43
      %p45 = scmp.ne.s32.totalorder %s34, %s37
      %p46 = scmp.eq.s32.totalorder %s15, 1
      %p47 = por %p45, %p46
      %p48 = scmp.ne.s32.totalorder %s37, %s38
      %p49 = scmp.eq.s32.totalorder %s15, 0
      %p50 = por %p48, %p49
      %p51 = scmp.ne.s32.totalorder %s37, %s38
      %p52 = scmp.eq.s32.totalorder %s16, 1
      %p53 = por %p51, %p52
      %p55 = scmp.ne.s32.totalorder %s38, %s54
      %p56 = scmp.eq.s32.totalorder %s16, 0
      %p57 = por %p55, %p56
      %s59 = sadd.s32 %s58, 1
      %p62 = scmp.eq.s32.totalorder %s10, 1
      %p63 = scmp.ne.s32.totalorder %s58, %s60
      %p64 = scmp.eq.s32.totalorder %s10, 0
      %p65 = por %p63, %p64
      %p66 = scmp.ne.s32.totalorder %s58, %s60
      %p67 = scmp.eq.s32.totalorder %s15, 1
      %p68 = por %p66, %p67
      %p69 = scmp.ne.s32.totalorder %s60, %s61
      %p70 = scmp.eq.s32.totalorder %s15, 0
      %p71 = por %p69, %p70
      %p72 = scmp.ne.s32.totalorder %s60, %s61
      %p73 = scmp.eq.s32.totalorder %s16, 1
      %p74 = por %p72, %p73
      %p76 = scmp.ne.s32.totalorder %s61, %s75
      %p77 = scmp.eq.s32.totalorder %s16, 0
      %p78 = por %p76, %p77
      %s80 = sadd.s32 %s79, 1
      %p83 = scmp.eq.s32.totalorder %s10, 1
      %p84 = scmp.ne.s32.totalorder %s79, %s81
      %p85 = scmp.eq.s32.totalorder %s10, 0
      %p86 = por %p84, %p85
      %p87 = scmp.ne.s32.totalorder %s79, %s81
      %p88 = scmp.eq.s32.totalorder %s15, 1
      %p89 = por %p87, %p88
      %p90 = scmp.ne.s32.totalorder %s81, %s82
      %p91 = scmp.eq.s32.totalorder %s15, 0
      %p92 = por %p90, %p91
      %p93 = scmp.ne.s32.totalorder %s81, %s82
      %p94 = scmp.eq.s32.totalorder %s16, 1
      %p95 = por %p93, %p94
      %p97 = scmp.ne.s32.totalorder %s82, %s96
      %p98 = scmp.eq.s32.totalorder %s16, 0
      %p99 = por %p97, %p98
      %s100 = ssub.s32 %s17, %s29
      %p101 = scmp.eq.s32.totalorder %s100, 0
      %s103 = sadd.s32 %s102, 1
      %s104 = scalar_select %p101, %s102, %s103
      %p107 = pneg %p101
      %p108 = scmp.eq.s32.totalorder %s10, 1
      %p109 = por %p107, %p108
      %p110 = scmp.ne.s32.totalorder %s102, %s105
      %p111 = scmp.eq.s32.totalorder %s10, 0
      %p112 = por %p110, %p111
      %p113 = scmp.ne.s32.totalorder %s102, %s105
      %p114 = scmp.eq.s32.totalorder %s15, 1
      %p115 = por %p113, %p114
      %p116 = scmp.ne.s32.totalorder %s105, %s106
      %p117 = scmp.eq.s32.totalorder %s15, 0
      %p118 = por %p116, %p117
      %p119 = scmp.ne.s32.totalorder %s105, %s106
      %p120 = scmp.eq.s32.totalorder %s16, 1
      %p121 = por %p119, %p120
      %p123 = scmp.ne.s32.totalorder %s106, %s122
      %p124 = scmp.eq.s32.totalorder %s16, 0
      %p125 = por %p123, %p124
      %p126 = scmp.le.s32.totalorder 1, %s10
      %p127 = scmp.lt.s32.totalorder %s10, 3
      %p128 = pnand %p126, %p127
      %p129 = pneg %p128
      // Predicated region
      $region9: #{cls_output_head.1} parent=5 // pred_check
        _
      $region10: #{cls_output_head.1} parent=5 // pred_check_branch
        %131 = sbr.rel (%p128) target = $region12
      $region11: #{cls_output_head.1} parent=5 // pred_region
        %s132 = ssub.s32 %s10, 1
        // Predicated region
        $region13: #{cls_output_head.1} parent=11 // pred_check
          %p133 = pneg %p71
        $region14: #{cls_output_head.1} parent=11 // pred_check_branch
          %135 = sbr.rel (%p133) target = $region16
        $region15: #{cls_output_head.1} parent=11 // pred_region
          _
        $region16: #{cls_output_head.1} parent=11 // pred_fallthru
          _
        // Predicated region
        $region17: #{cls_output_head.1} parent=11 // pred_check
          %p136 = pneg %p92
        $region18: #{cls_output_head.1} parent=11 // pred_check_branch
          %138 = sbr.rel (%p136) target = $region20
        $region19: #{cls_output_head.1} parent=11 // pred_region
          _
        $region20: #{cls_output_head.1} parent=11 // pred_fallthru
          _
      $region12: #{cls_output_head.1} parent=5 // pred_fallthru
        _
      %p139 = scmp.lt.s32.totalorder %s10, 2
      // Predicated region
      $region21: #{cls_output_head.1} parent=5 // pred_check
        %p140 = pneg %p139
      $region22: #{cls_output_head.1} parent=5 // pred_check_branch
        %142 = sbr.rel (%p140) target = $region24
      $region23: #{cls_output_head.1} parent=5 // pred_region
        // Predicated region
        $region25: #{cls_output_head.1} parent=23 // pred_check
          %p143 = pneg %p44
        $region26: #{cls_output_head.1} parent=23 // pred_check_branch
          %145 = sbr.rel (%p143) target = $region28
        $region27: #{cls_output_head.1} parent=23 // pred_region
          %s146 = sand.u32 %s34, 1
          %s147 = sand.u32 %s34, 1
          %s148 = smul.addr %s147, 8
          %s149 = scalar_lea.vmem [#allocation3], %s148
          %s150 = smul.u32 2, %s17
          %s151 = smul.addr %s150, 2
          %s152 = sadd.s32 %s18, %s151
          %s153 = smul.addr %s152, 4
          %s154 = scalar_lea.vmem %s0, %s153
          // Predicated region
          $region29: #{cls_output_head.1} parent=27 // pred_check
            _
          $region30: #{cls_output_head.1} parent=27 // pred_check_branch
            %156 = sbr.rel (0) target = $region32
          $region31: #{cls_output_head.1} parent=27 // pred_region
            // Predicated region
            $region33: #{cls_output_head.1} parent=31 // pred_check
              _
            $region34: #{cls_output_head.1} parent=31 // pred_check_branch
              %158 = sbr.rel target = $region36
            $region35: #{cls_output_head.1} parent=31 // pred_region
              // Predicated region
              $region48: #{cls_output_head.1} parent=35 // pred_check
                _
              $region49: #{cls_output_head.1} parent=35 // pred_check_branch
                %175 = sbr.rel (0) target = $region51
              $region50: #{cls_output_head.1} parent=35 // pred_region
                loop: start=0, step=1, limit=1
                $region52: #{cls_output_head.1} parent=50 // loop_pre_header
                  _
                $region53: #{cls_output_head.1} parent=50 // loop_header
                  %s177 = sphi 0, %s181
                  %p178 = scmp.ge.s32.totalorder %s177, 1
                  %s182 = sphi %s154, %s154
                  %s183 = sphi %s149, %s149
                $region54: #{cls_output_head.1} parent=50 // loop_header_branch
                  %180 = sbr.rel (%p178) target = $region58
                $region55: #{cls_output_head.1} parent=50 // loop_body
                  _
                $region56: #{cls_output_head.1} parent=50 // loop_footer
                  %s181 = sadd.s32 1, %s177
                $region57: #{cls_output_head.1} parent=50 // loop_footer_branch
                  %176 = sbr.rel target = $region53
                $region58: #{cls_output_head.1} parent=50 // loop_exit
                  _
                loop: start=0, step=1, limit=1
                $region59: #{cls_output_head.1} parent=50 // loop_pre_header
                  _
                $region60: #{cls_output_head.1} parent=50 // loop_header
                  %s186 = sphi 0, %s190
                  %p187 = scmp.ge.s32.totalorder %s186, 1
                  %s191 = sphi %s154, %s154
                  %s192 = sphi %s149, %s149
                $region61: #{cls_output_head.1} parent=50 // loop_header_branch
                  %189 = sbr.rel (%p187) target = $region65
                $region62: #{cls_output_head.1} parent=50 // loop_body
                  %v193 = vld [vmem:[%s191] sm:$0xf]
                  %194 = vst [vmem:[%s192] sm:$0xf] %v193
                  %v195 = vld [vmem:[%s191 + $0x8] sm:$0xf]
                  %196 = vst [vmem:[%s192 + $0x4] sm:$0xf] %v195
                $region63: #{cls_output_head.1} parent=50 // loop_footer
                  %s190 = sadd.s32 1, %s186
                $region64: #{cls_output_head.1} parent=50 // loop_footer_branch
                  %185 = sbr.rel target = $region60
                $region65: #{cls_output_head.1} parent=50 // loop_exit
                  _
              $region51: #{cls_output_head.1} parent=35 // pred_fallthru
                _
            $region36: #{cls_output_head.1} parent=31 // pred_fallthru
              _
            // Predicated region
            $region37: #{cls_output_head.1} parent=31 // pred_check
              _
            $region38: #{cls_output_head.1} parent=31 // pred_check_branch
              %160 = sbr.rel (0) target = $region40
            $region39: #{cls_output_head.1} parent=31 // pred_region
              loop: start=0, step=1, limit=1
              $region41: #{cls_output_head.1} parent=39 // loop_pre_header
                _
              $region42: #{cls_output_head.1} parent=39 // loop_header
                %s163 = sphi 0, %s167
                %p164 = scmp.ge.s32.totalorder %s163, 1
                %s168 = sphi %s154, %s154
                %s169 = sphi %s149, %s149
              $region43: #{cls_output_head.1} parent=39 // loop_header_branch
                %166 = sbr.rel (%p164) target = $region47
              $region44: #{cls_output_head.1} parent=39 // loop_body
                %v170 = vld [vmem:[%s168] sm:$0xf]
                %171 = vst [vmem:[%s169] sm:$0xf] %v170
                %v172 = vld [vmem:[%s168 + $0x8] sm:$0xf]
                %173 = vst [vmem:[%s169 + $0x4] sm:$0xf] %v172
              $region45: #{cls_output_head.1} parent=39 // loop_footer
                %s167 = sadd.s32 1, %s163
              $region46: #{cls_output_head.1} parent=39 // loop_footer_branch
                %162 = sbr.rel target = $region42
              $region47: #{cls_output_head.1} parent=39 // loop_exit
                _
            $region40: #{cls_output_head.1} parent=31 // pred_fallthru
              _
          $region32: #{cls_output_head.1} parent=27 // pred_fallthru
            _
          %197 = vnop
        $region28: #{cls_output_head.1} parent=23 // pred_fallthru
          _
      $region24: #{cls_output_head.1} parent=5 // pred_fallthru
        _
      %p198 = scmp.le.s32.totalorder 1, %s10
      %p199 = scmp.lt.s32.totalorder %s10, 3
      %p200 = pnand %p198, %p199
      %p201 = pneg %p200
      // Predicated region
      $region66: #{cls_output_head.1} parent=5 // pred_check
        _
      $region67: #{cls_output_head.1} parent=5 // pred_check_branch
        %203 = sbr.rel (%p200) target = $region69
      $region68: #{cls_output_head.1} parent=5 // pred_region
        %s204 = ssub.s32 %s10, 1
        %s205 = sand.u32 %s37, 1
        %s206 = sand.u32 %s37, 1
        %s207 = smul.addr %s206, 8
        %s208 = scalar_lea.vmem [#allocation3], %s207
        // Predicated region
        $region70: #{cls_output_head.1} parent=68 // pred_check
          %p209 = pneg %p50
        $region71: #{cls_output_head.1} parent=68 // pred_check_branch
          %211 = sbr.rel (%p209) target = $region73
        $region72: #{cls_output_head.1} parent=68 // pred_region
          _
        $region73: #{cls_output_head.1} parent=68 // pred_fallthru
          _
        %s212 = sand.u32 %s37, 1
        %s213 = sand.u32 %s37, 1
        %s214 = smul.addr %s213, 8
        %s215 = scalar_lea.vmem [#allocation3], %s214
        %p216 = pneg %p50
        %p217 = pneg %p47
        %p218 = pneg %p71
        %p219 = pneg %p68
        %p220 = pneg %p92
        %p221 = pneg %p89
        %p222 = pneg %p118
        %p223 = pneg %p115
        %s224 = smul.u32 2, %s19
        %p225 = scmp.eq.s32.totalorder %s20, 0
        // Predicated region
        $region74: #{cls_output_head.1} parent=68 // pred_check
          %p226 = pneg %p225
        $region75: #{cls_output_head.1} parent=68 // pred_check_branch
          %228 = sbr.rel (%p226) target = $region77
        $region76: #{cls_output_head.1} parent=68 // pred_region
          %229 = vst [vmem:[#allocation2] sm:$0x3] 0.0
        $region77: #{cls_output_head.1} parent=68 // pred_fallthru
          _
        %v230 = vld [vmem:[%s208] sm:$0xf]
        %v231 = vld [vmem:[%s208 + $0x4] sm:$0xf]
        %vm232 = vcmask 1043456
        %v233 = vsel %vm232, %v230, 0.0
        %234 = vadd.xlane.f32.xlu0 %v233
        %v235 = vpop.xlane.xlu0 %234
        %v236 = vsel %vm232, %v231, 0.0
        %237 = vadd.xlane.f32.xlu0 %v236
        %v238 = vpop.xlane.xlu0 %237
        %v239 = vld [vmem:[#allocation2] sm:$0x3]
        %v242 = vlaneseq
        %v243 = vand.u32 %v242, 127
        %v244 = vlaneseq
        %v245 = vshrl.u32 %v244, 7
        %v246 = vsub.s32 %v243, %v245
        %v247 = vrot.slane %v235, %v246
        %v248 = vlaneseq
        %v249 = vshrl.u32 %v248, 7
        %v250 = vsub.s32 %v243, %v249
        %v251 = vrot.slane %v238, %v250
        %vm252 = vcmask 1041409
        %v253 = vsel %vm252, %v251, %v247
        %v255 = vadd.f32 %v239, %v253
        %vm256 = vcmask 25600
        %257 = vst.msk [vmem:[#allocation2] sm:$0x3] %vm256, %v255
        %p258 = scmp.eq.s32.totalorder %s20, 1
        // Predicated region
        $region78: #{cls_output_head.1} parent=68 // pred_check
          %p259 = pneg %p258
        $region79: #{cls_output_head.1} parent=68 // pred_check_branch
          %261 = sbr.rel (%p259) target = $region81
        $region80: #{cls_output_head.1} parent=68 // pred_region
          %v262 = vld [vmem:[#allocation2] sm:$0x3]
          %v263 = vld [vmem:[%s1] sm:$0xff]
          %v264 = vld [vmem:[%s1 + $0x8] sm:$0xff]
          %v265 = vld [vmem:[%s1 + $0x10] sm:$0xff]
          %v266 = vld [vmem:[%s1 + $0x18] sm:$0xff]
          %v267 = vld [vmem:[%s1 + $0x20] sm:$0xff]
          %v268 = vld [vmem:[%s1 + $0x28] sm:$0xff]
          %v269 = vld [vmem:[%s1 + $0x30] sm:$0xff]
          %v270 = vld [vmem:[%s1 + $0x38] sm:$0xff]
          %v271 = vld [vmem:[%s1 + $0x40] sm:$0xff]
          %v272 = vld [vmem:[%s1 + $0x48] sm:$0xff]
          %v273 = vld [vmem:[%s1 + $0x50] sm:$0xff]
          %v274 = vld [vmem:[%s1 + $0x58] sm:$0xff]
          %v275 = vld [vmem:[%s1 + $0x60] sm:$0xff]
          %v276 = vld [vmem:[%s1 + $0x68] sm:$0xff]
          %v277 = vld [vmem:[%s1 + $0x70] sm:$0xff]
          %v278 = vld [vmem:[%s1 + $0x78] sm:$0xff]
          %v279 = vld [vmem:[%s2] sm:$0x1]
          %v281 = vlaneseq
          %v282 = vshrl.u32 %v281, 7
          %v283 = vsub.s32 0, %v282
          %v284 = vrot.slane %v279, %v283
          %286 = vmatprep.subr.mxu0 0.0
          %287 = vmatpush1.msra.mxu0 %v263
          %288 = vmatprep.subr.mxu0 0.0
          %289 = vmatpush1.msra.mxu0 %v264
          %290 = vmatprep.subr.mxu0 0.0
          %291 = vmatpush1.msra.mxu0 %v265
          %292 = vmatprep.subr.mxu0 0.0
          %293 = vmatpush1.msra.mxu0 %v266
          %294 = vmatprep.subr.mxu0 0.0
          %295 = vmatpush1.msra.mxu0 %v267
          %296 = vmatprep.subr.mxu0 0.0
          %297 = vmatpush1.msra.mxu0 %v268
          %298 = vmatprep.subr.mxu0 0.0
          %299 = vmatpush1.msra.mxu0 %v269
          %300 = vmatprep.subr.mxu0 0.0
          %301 = vmatpush1.msra.mxu0 %v270
          %302 = vmatprep.subr.mxu0 0.0
          %303 = vmatpush1.msra.mxu0 %v271
          %304 = vmatprep.subr.mxu0 0.0
          %305 = vmatpush1.msra.mxu0 %v272
          %306 = vmatprep.subr.mxu0 0.0
          %307 = vmatpush1.msra.mxu0 %v273
          %308 = vmatprep.subr.mxu0 0.0
          %309 = vmatpush1.msra.mxu0 %v274
          %310 = vmatprep.subr.mxu0 0.0
          %311 = vmatpush1.msra.mxu0 %v275
          %312 = vmatprep.subr.mxu0 0.0
          %313 = vmatpush1.msra.mxu0 %v276
          %314 = vmatprep.subr.mxu0 0.0
          %315 = vmatpush1.msra.mxu0 %v277
          %316 = vmatprep.subr.mxu0 0.0
          %317 = vmatpush1.msra.mxu0 %v278
          %318 = vmatprep.subr.mxu0 0.0
          %319 = vmatpush1.msra.mxu0 0.0
          %320 = vmatprep.subr.mxu0 0.0
          %321 = vmatpush1.msra.mxu0 0.0
          %322 = vmatprep.subr.mxu0 0.0
          %323 = vmatpush1.msra.mxu0 0.0
          %324 = vmatprep.subr.mxu0 0.0
          %325 = vmatpush1.msra.mxu0 0.0
          %326 = vmatprep.subr.mxu0 0.0
          %327 = vmatpush1.msra.mxu0 0.0
          %328 = vmatprep.subr.mxu0 0.0
          %329 = vmatpush1.msra.mxu0 0.0
          %330 = vmatprep.subr.mxu0 0.0
          %331 = vmatpush1.msra.mxu0 0.0
          %332 = vmatprep.subr.mxu0 0.0
          %333 = vmatpush1.msra.mxu0 0.0
          %334 = vmatprep.subr.mxu0 0.0
          %335 = vmatpush1.msra.mxu0 0.0
          %336 = vmatprep.subr.mxu0 0.0
          %337 = vmatpush1.msra.mxu0 0.0
          %338 = vmatprep.subr.mxu0 0.0
          %339 = vmatpush1.msra.mxu0 0.0
          %340 = vmatprep.subr.mxu0 0.0
          %341 = vmatpush1.msra.mxu0 0.0
          %342 = vmatprep.subr.mxu0 0.0
          %343 = vmatpush1.msra.mxu0 0.0
          %344 = vmatprep.subr.mxu0 0.0
          %345 = vmatpush1.msra.mxu0 0.0
          %346 = vmatprep.subr.mxu0 0.0
          %347 = vmatpush1.msra.mxu0 0.0
          %348 = vmatprep.subr.mxu0 0.0
          %349 = vmatpush1.msra.mxu0 0.0
          %350 = vmatprep.mubr.f32.mxu0 0.0
          %351 = vmatmul.mubr.f32.gmra.mrb[0].mxu0 %v262
          %v352 = vpop.f32.mrb[0].mxu0
          %v353 = vadd.f32 %v284, %v352
          %v354 = vpop.f32.mrb[0].mxu0
          %355 = vdwg.mxu0
          %356 = vst [vmem:[#allocation4] sm:$0x3] %v353
        $region81: #{cls_output_head.1} parent=68 // pred_fallthru
          _
        // Predicated region
        $region82: #{cls_output_head.1} parent=68 // pred_check
          %p357 = pneg %p115
        $region83: #{cls_output_head.1} parent=68 // pred_check_branch
          %359 = sbr.rel (%p357) target = $region85
        $region84: #{cls_output_head.1} parent=68 // pred_region
          %s361 = ssub.s32 32, 32
          %362 = vsyncadd [#allocation5], %s361
          %s363 = smul.addr %s19, 32
          %s364 = scalar_lea.hbm %s3, %s363
          %s366 = sshll.u32 [#allocation4], 4
          %s367 = int_to_ptr.vmem [resolvable:$true] %s366
          %369 = dma.vmem_to_hbm [thread:$0]  %s367, 32, %s364, [#allocation5]
        $region85: #{cls_output_head.1} parent=68 // pred_fallthru
          _
        // Predicated region
        $region86: #{cls_output_head.1} parent=68 // pred_check
          %p370 = pneg %p115
        $region87: #{cls_output_head.1} parent=68 // pred_check_branch
          %372 = sbr.rel (%p370) target = $region89
        $region88: #{cls_output_head.1} parent=68 // pred_region
          %373 = dma.done [#allocation5], 32
        $region89: #{cls_output_head.1} parent=68 // pred_fallthru
          _
      $region69: #{cls_output_head.1} parent=5 // pred_fallthru
        _
      %p374 = scmp.le.s32.totalorder 2, %s10
      // Predicated region
      $region90: #{cls_output_head.1} parent=5 // pred_check
        %p375 = pneg %p374
      $region91: #{cls_output_head.1} parent=5 // pred_check_branch
        %377 = sbr.rel (%p375) target = $region93
      $region92: #{cls_output_head.1} parent=5 // pred_region
        %s378 = ssub.s32 %s10, 2
      $region93: #{cls_output_head.1} parent=5 // pred_fallthru
        _
    $region6: #{cls_output_head.1} parent=1 // loop_footer
      %s14 = sadd.s32 1, %s10
    $region7: #{cls_output_head.1} parent=1 // loop_footer_branch
      %9 = sbr.rel target = $region3
    $region8: #{cls_output_head.1} parent=1 // loop_exit
      _
    %379 = vsyncpa [#allocation5], 1
    %s380 = scalar_lea.sflag [#allocation5], 1
    %381 = vsyncpa %s380, 1

</llo_original>
